<compile_context>
chip_gen: v5e
topology: v5e:2x2
jax: 0.10.0
libtpu: 0.0.40
codegen_flags: <defaults>
</compile_context>

<pallas_src>
from functools import partial

import jax
import jax.numpy as jnp
from jax.experimental import pallas as pl
from jax.experimental.pallas import tpu as pltpu


_INV_SQRT2 = 0.7071067811865476


def _gelu_exact(x):
    """Exact (erf-based) GELU, matching torch nn.GELU() default.

    erf via Abramowitz & Stegun 7.1.26 (|err| < 1.5e-7).  The divide is an
    EUP approximate reciprocal + one Newton step (rel err ~1e-8), so only
    exp / mul / add / select / recip are emitted -> safe Mosaic lowering and
    low VALU pressure.
    """
    u = x * _INV_SQRT2
    a = jnp.abs(u)
    d = 1.0 + 0.3275911 * a
    t = pl.reciprocal(d, approx=True)      # EUP slot (essentially free)
    t = t * (2.0 - d * t)                  # one Newton step -> full f32 accuracy
    poly = ((((1.061405429 * t - 1.453152027) * t + 1.421413741) * t
             - 0.284496736) * t + 0.254829592) * t
    erf_abs = 1.0 - poly * jnp.exp(-a * a)  # exp on EUP
    erf_u = jnp.where(u >= 0.0, erf_abs, -erf_abs)
    return 0.5 * x * (1.0 + erf_u)


def _ff_kernel(x_ref, g_ref, beta_ref, w1_ref, b1_ref, w2_ref, b2_ref, o_ref, *, eps):
    # x_ref:  (rows_blk, dim_in)        f32
    # g_ref, beta_ref: (1, dim_in)      f32
    # w1_ref: (dim_in, hidden)          f32 or bf16 (matmul dtype)
    # b1_ref: (1, hidden)               f32
    # w2_ref: (hidden, dim_in)          f32 or bf16
    # b2_ref: (1, dim_in)               f32
    # o_ref:  (rows_blk, dim_in)
    x = x_ref[...].astype(jnp.float32)

    # LayerNorm over the last dim (biased variance, eps inside the rsqrt) + affine.
    mean = jnp.mean(x, axis=-1, keepdims=True)
    xc = x - mean
    var = jnp.mean(xc * xc, axis=-1, keepdims=True)
    xn = xc * jax.lax.rsqrt(var + eps)
    xn = xn * g_ref[...] + beta_ref[...]

    # Linear(dim_in -> hidden): MXU in the weights' dtype, f32 accumulation.
    h = jnp.dot(xn.astype(w1_ref.dtype), w1_ref[...],
                preferred_element_type=jnp.float32) + b1_ref[...]
    h = _gelu_exact(h)

    # Linear(hidden -> dim_in).  Dropout(p=0) layers are identity.
    out = jnp.dot(h.astype(w2_ref.dtype), w2_ref[...],
                  preferred_element_type=jnp.float32) + b2_ref[...]
    o_ref[...] = out.astype(o_ref.dtype)


def _vmem_bytes_estimate(block_rows, dim_in, hidden, w_bytes, single_buffer):
    """Rough per-grid-step VMEM footprint (bytes), with headroom factors."""
    bufs = 1 if single_buffer else 2
    io = 2 * 2 * block_rows * dim_in * 4                   # x + out, double-buffered
    wts = bufs * 2 * dim_in * hidden * w_bytes             # w1 + w2
    small = bufs * (3 * dim_in + hidden) * 4               # gamma/beta/b1/b2
    tmp = 4 * block_rows * hidden * 4                      # h + GELU temporaries
    return io + wts + small + tmp


def _choose_block_rows(rows, dim_in, hidden, w_bytes, budget=48 * 2**20):
    """Pick a row-tile size that (a) divides rows, (b) is a multiple of 8 (or the
    full slab), (c) gives >= 2 grid steps when possible (v7x: 2 TensorCores),
    (d) stays large (per-step overhead ~0.35us), (e) fits a VMEM budget."""
    if rows <= 8:
        return rows
    cands = [d for d in range(8, min(rows, 512) + 1, 8) if rows % d == 0]
    best = max(cands) if cands else rows        # full slab is always layout-legal
    if best == rows and cands:
        two_step = [d for d in cands if rows // d >= 2]
        if two_step:                            # engage both v7x TensorCores
            best = max(two_step)
    while _vmem_bytes_estimate(best, dim_in, hidden, w_bytes, True) > budget:
        smaller = [d for d in cands if d < best]
        if not smaller:
            break
        best = max(smaller)
    return best


def feed_forward(x, gamma, beta, w1, b1, w2, b2, *, eps=1e-5, block_rows=None,
                 matmul_dtype=jnp.float32):
    """x: (b, n, dim_in) -> (b, n, dim_in), matching the PyTorch FeedForward.

    matmul_dtype=jnp.bfloat16 feeds the MXU (and holds w1/w2 in VMEM) in bf16
    with f32 accumulation — the fast path on v6e/v7x.  Default f32 matches
    torch fp32 semantics bit-for-tolerance.
    """
    b, n, dim_in = x.shape
    hidden = w1.shape[1]
    rows = b * n
    w_bytes = jax.dtypes.canonicalize_dtype(matmul_dtype).itemsize

    if block_rows is None:
        block_rows = _choose_block_rows(rows, dim_in, hidden, w_bytes)
    assert rows % block_rows == 0, (rows, block_rows)   # chooser guarantees this
    grid = (rows // block_rows,)

    f32 = jnp.float32
    x2 = x.reshape(rows, dim_in)
    args = (
        x2,
        gamma.reshape(1, dim_in).astype(f32),
        beta.reshape(1, dim_in).astype(f32),
        w1.astype(matmul_dtype),
        b1.reshape(1, hidden).astype(f32),
        w2.astype(matmul_dtype),
        b2.reshape(1, dim_in).astype(f32),
    )

    # Advisory cost estimate for XLA scheduling around the fused custom call.
    flops = 4 * rows * dim_in * hidden + 10 * rows * (dim_in + hidden)
    transcendentals = 2 * rows * hidden                  # exp + recip per GELU elem
    bytes_accessed = (2 * rows * dim_in) * 4 + 2 * dim_in * hidden * w_bytes \
                     + (3 * dim_in + hidden) * 4

    vmem_est = _vmem_bytes_estimate(block_rows, dim_in, hidden, w_bytes, True)
    vmem_limit = int(min(100 * 2**20, max(32 * 2**20, 2 * vmem_est)))

    def build_specs(single_buffer_weights):
        def const_spec(shape):
            # Constant index_map -> block never changes; single-buffer it to
            # avoid the default 2x weight footprint in VMEM.
            if single_buffer_weights:
                return pl.BlockSpec(shape, lambda i: (0, 0),
                                    pipeline_mode=pl.Buffered(1))
            return pl.BlockSpec(shape, lambda i: (0, 0))
        in_specs = [
            pl.BlockSpec((block_rows, dim_in), lambda i: (i, 0)),   # x rows vary
            const_spec((1, dim_in)),                                # gamma
            const_spec((1, dim_in)),                                # beta
            const_spec((dim_in, hidden)),                           # w1
            const_spec((1, hidden)),                                # b1
            const_spec((hidden, dim_in)),                           # w2
            const_spec((1, dim_in)),                                # b2
        ]
        out_spec = pl.BlockSpec((block_rows, dim_in), lambda i: (i, 0))
        return in_specs, out_spec

    def run(single_buffer_weights):
        in_specs, out_spec = build_specs(single_buffer_weights)
        return pl.pallas_call(
            partial(_ff_kernel, eps=eps),
            out_shape=jax.ShapeDtypeStruct((rows, dim_in), x.dtype),
            grid=grid,
            in_specs=in_specs,
            out_specs=out_spec,
            compiler_params=pltpu.CompilerParams(
                dimension_semantics=("parallel",),      # row tiles independent
                vmem_limit_bytes=vmem_limit),
            cost_estimate=pl.CostEstimate(
                flops=flops, transcendentals=transcendentals,
                bytes_accessed=bytes_accessed),
        )(*args)

    try:
        out = run(True)    # single-buffered resident weights (VMEM win, esp. v7x)
    except Exception:      # pipeline_mode not supported -> default double-buffering
        out = run(False)
    return out.reshape(b, n, dim_in)


def reference(x, gamma, beta, w1, b1, w2, b2, *, eps=1e-5):
    """Pure-JAX reproduction of the PyTorch forward (exact erf GELU)."""
    mean = jnp.mean(x, axis=-1, keepdims=True)
    var = jnp.mean((x - mean) ** 2, axis=-1, keepdims=True)
    xn = (x - mean) / jnp.sqrt(var + eps) * gamma + beta
    h = xn @ w1 + b1
    h = jax.nn.gelu(h, approximate=False)   # torch nn.GELU() default (exact)
    return h @ w2 + b2


if __name__ == "__main__":
    # Small shapes consistent with the module: dim_in=32, mlp_ratio=4 -> hidden=128.
    b, n, dim_in, mlp_ratio = 2, 8, 32, 4
    hidden = mlp_ratio * dim_in

    key = jax.random.PRNGKey(0)
    k_x, k_g, k_b, k_w1, k_b1, k_w2, k_b2 = jax.random.split(key, 7)
    x = jax.random.normal(k_x, (b, n, dim_in), dtype=jnp.float32)
    gamma = 1.0 + 0.05 * jax.random.normal(k_g, (dim_in,), dtype=jnp.float32)
    beta = 0.02 * jax.random.normal(k_b, (dim_in,), dtype=jnp.float32)
    w1 = 0.05 * jax.random.normal(k_w1, (dim_in, hidden), dtype=jnp.float32)
    b1 = 0.01 * jax.random.normal(k_b1, (hidden,), dtype=jnp.float32)
    w2 = 0.05 * jax.random.normal(k_w2, (hidden, dim_in), dtype=jnp.float32)
    b2 = 0.01 * jax.random.normal(k_b2, (dim_in,), dtype=jnp.float32)

    ref = reference(x, gamma, beta, w1, b1, w2, b2)

    # 1) f32 MXU path: must match torch-exact semantics tightly.
    out = jax.block_until_ready(feed_forward(x, gamma, beta, w1, b1, w2, b2))
    assert out.shape == (b, n, dim_in), out.shape
    err_f32 = float(jnp.max(jnp.abs(out - ref)))
    assert jnp.allclose(out, ref, rtol=1e-4, atol=2e-5), err_f32

    # 2) bf16 MXU path (v6e/v7x fast path): f32 accumulation, looser tolerance.
    out_bf16 = jax.block_until_ready(
        feed_forward(x, gamma, beta, w1, b1, w2, b2, matmul_dtype=jnp.bfloat16))
    err_bf16 = float(jnp.max(jnp.abs(out_bf16 - ref)))
    assert jnp.allclose(out_bf16, ref, rtol=2e-2, atol=2e-2), err_bf16

    print("KERNEL_OK")
</pallas_src>

<mosaic_0001>
module attributes {stable_mosaic.version = 11 : i64} {
  func.func @_ff_kernel(%arg0: i32, %arg1: memref<8x32xf32, #tpu.memory_space<vmem>>, %arg2: memref<1x32xf32, #tpu.memory_space<vmem>>, %arg3: memref<1x32xf32, #tpu.memory_space<vmem>>, %arg4: memref<32x128xf32, #tpu.memory_space<vmem>>, %arg5: memref<1x128xf32, #tpu.memory_space<vmem>>, %arg6: memref<128x32xf32, #tpu.memory_space<vmem>>, %arg7: memref<1x32xf32, #tpu.memory_space<vmem>>, %arg8: memref<8x32xf32, #tpu.memory_space<vmem>>) attributes {dimension_semantics = [#tpu.dimension_semantics<parallel>], iteration_bounds = array<i64: 2>, scalar_prefetch = 0 : i64, scratch_operands = 0 : i64, tpu.core_type = #tpu.core_type<tc>, window_params = [{transform_indices = @transform_0, window_bounds = array<i64: 8, 32>}, {pipeline_mode = #tpu.pipeline_mode<synchronous>, transform_indices = @transform_1, window_bounds = array<i64: 1, 32>}, {pipeline_mode = #tpu.pipeline_mode<synchronous>, transform_indices = @transform_2, window_bounds = array<i64: 1, 32>}, {pipeline_mode = #tpu.pipeline_mode<synchronous>, transform_indices = @transform_3, window_bounds = array<i64: 32, 128>}, {pipeline_mode = #tpu.pipeline_mode<synchronous>, transform_indices = @transform_4, window_bounds = array<i64: 1, 128>}, {pipeline_mode = #tpu.pipeline_mode<synchronous>, transform_indices = @transform_5, window_bounds = array<i64: 128, 32>}, {pipeline_mode = #tpu.pipeline_mode<synchronous>, transform_indices = @transform_6, window_bounds = array<i64: 1, 32>}, {transform_indices = @transform_7, window_bounds = array<i64: 8, 32>}]} {
    %c0 = arith.constant 0 : index
    %c0_0 = arith.constant 0 : index
    %0 = vector.load %arg1[%c0, %c0_0] : memref<8x32xf32, #tpu.memory_space<vmem>>, vector<8x32xf32>
    %cst = arith.constant dense<0.000000e+00> : vector<8xf32>
    %1 = vector.multi_reduction <add>, %0, %cst [1] : vector<8x32xf32> to vector<8xf32>
    %2 = vector.shape_cast %1 : vector<8xf32> to vector<8x1xf32>
    %cst_1 = arith.constant 3.200000e+01 : f32
    %3 = vector.broadcast %cst_1 : f32 to vector<8x1xf32>
    %4 = arith.divf %2, %3 : vector<8x1xf32>
    %5 = vector.broadcast %4 : vector<8x1xf32> to vector<8x32xf32>
    %6 = arith.subf %0, %5 : vector<8x32xf32>
    %7 = arith.mulf %6, %6 : vector<8x32xf32>
    %cst_2 = arith.constant dense<0.000000e+00> : vector<8xf32>
    %8 = vector.multi_reduction <add>, %7, %cst_2 [1] : vector<8x32xf32> to vector<8xf32>
    %9 = vector.shape_cast %8 : vector<8xf32> to vector<8x1xf32>
    %cst_3 = arith.constant 3.200000e+01 : f32
    %10 = vector.broadcast %cst_3 : f32 to vector<8x1xf32>
    %11 = arith.divf %9, %10 : vector<8x1xf32>
    %cst_4 = arith.constant 9.99999974E-6 : f32
    %12 = vector.broadcast %cst_4 : f32 to vector<8x1xf32>
    %13 = arith.addf %11, %12 : vector<8x1xf32>
    %14 = math.rsqrt %13 : vector<8x1xf32>
    %15 = vector.broadcast %14 : vector<8x1xf32> to vector<8x32xf32>
    %16 = arith.mulf %6, %15 : vector<8x32xf32>
    %c0_5 = arith.constant 0 : index
    %c0_6 = arith.constant 0 : index
    %17 = vector.load %arg2[%c0_5, %c0_6] : memref<1x32xf32, #tpu.memory_space<vmem>>, vector<1x32xf32>
    %18 = vector.broadcast %17 : vector<1x32xf32> to vector<8x32xf32>
    %19 = arith.mulf %16, %18 : vector<8x32xf32>
    %c0_7 = arith.constant 0 : index
    %c0_8 = arith.constant 0 : index
    %20 = vector.load %arg3[%c0_7, %c0_8] : memref<1x32xf32, #tpu.memory_space<vmem>>, vector<1x32xf32>
    %21 = vector.broadcast %20 : vector<1x32xf32> to vector<8x32xf32>
    %22 = arith.addf %19, %21 : vector<8x32xf32>
    %c0_9 = arith.constant 0 : index
    %c0_10 = arith.constant 0 : index
    %23 = vector.load %arg4[%c0_9, %c0_10] : memref<32x128xf32, #tpu.memory_space<vmem>>, vector<32x128xf32>
    %cst_11 = arith.constant dense<0.000000e+00> : vector<8x128xf32>
    %24 = tpu.matmul %22, %23, %cst_11 {dimension_numbers = #tpu.dot_dimension_numbers<[1], [0], [0], [1], [0, 0, 1, 1], [], []>} : vector<8x32xf32>, vector<32x128xf32>, vector<8x128xf32> -> vector<8x128xf32>
    %c0_12 = arith.constant 0 : index
    %c0_13 = arith.constant 0 : index
    %25 = vector.load %arg5[%c0_12, %c0_13] : memref<1x128xf32, #tpu.memory_space<vmem>>, vector<1x128xf32>
    %26 = vector.broadcast %25 : vector<1x128xf32> to vector<8x128xf32>
    %27 = arith.addf %24, %26 : vector<8x128xf32>
    %cst_14 = arith.constant 0.707106769 : f32
    %28 = vector.broadcast %cst_14 : f32 to vector<8x128xf32>
    %29 = arith.mulf %27, %28 : vector<8x128xf32>
    %30 = math.absf %29 : vector<8x128xf32>
    %cst_15 = arith.constant 0.327591091 : f32
    %31 = vector.broadcast %cst_15 : f32 to vector<8x128xf32>
    %32 = arith.mulf %31, %30 : vector<8x128xf32>
    %cst_16 = arith.constant 1.000000e+00 : f32
    %33 = vector.broadcast %cst_16 : f32 to vector<8x128xf32>
    %34 = arith.addf %33, %32 : vector<8x128xf32>
    %35 = tpu.reciprocal %34 {approx = true} : vector<8x128xf32> -> vector<8x128xf32>
    %36 = arith.mulf %34, %35 : vector<8x128xf32>
    %cst_17 = arith.constant 2.000000e+00 : f32
    %37 = vector.broadcast %cst_17 : f32 to vector<8x128xf32>
    %38 = arith.subf %37, %36 : vector<8x128xf32>
    %39 = arith.mulf %35, %38 : vector<8x128xf32>
    %cst_18 = arith.constant 1.06140542 : f32
    %40 = vector.broadcast %cst_18 : f32 to vector<8x128xf32>
    %41 = arith.mulf %40, %39 : vector<8x128xf32>
    %cst_19 = arith.constant 1.45315206 : f32
    %42 = vector.broadcast %cst_19 : f32 to vector<8x128xf32>
    %43 = arith.subf %41, %42 : vector<8x128xf32>
    %44 = arith.mulf %43, %39 : vector<8x128xf32>
    %cst_20 = arith.constant 1.42141378 : f32
    %45 = vector.broadcast %cst_20 : f32 to vector<8x128xf32>
    %46 = arith.addf %44, %45 : vector<8x128xf32>
    %47 = arith.mulf %46, %39 : vector<8x128xf32>
    %cst_21 = arith.constant 0.284496725 : f32
    %48 = vector.broadcast %cst_21 : f32 to vector<8x128xf32>
    %49 = arith.subf %47, %48 : vector<8x128xf32>
    %50 = arith.mulf %49, %39 : vector<8x128xf32>
    %cst_22 = arith.constant 0.254829586 : f32
    %51 = vector.broadcast %cst_22 : f32 to vector<8x128xf32>
    %52 = arith.addf %50, %51 : vector<8x128xf32>
    %53 = arith.mulf %52, %39 : vector<8x128xf32>
    %cst_23 = arith.constant 0.000000e+00 : f32
    %54 = vector.broadcast %cst_23 : f32 to vector<8x128xf32>
    %55 = arith.subf %54, %30 : vector<8x128xf32>
    %56 = arith.mulf %55, %30 : vector<8x128xf32>
    %57 = math.exp %56 : vector<8x128xf32>
    %58 = arith.mulf %53, %57 : vector<8x128xf32>
    %cst_24 = arith.constant 1.000000e+00 : f32
    %59 = vector.broadcast %cst_24 : f32 to vector<8x128xf32>
    %60 = arith.subf %59, %58 : vector<8x128xf32>
    %cst_25 = arith.constant 0.000000e+00 : f32
    %61 = vector.broadcast %cst_25 : f32 to vector<8x128xf32>
    %62 = arith.cmpf oge, %29, %61 : vector<8x128xf32>
    %cst_26 = arith.constant 0.000000e+00 : f32
    %63 = vector.broadcast %cst_26 : f32 to vector<8x128xf32>
    %64 = arith.subf %63, %60 : vector<8x128xf32>
    %65 = arith.select %62, %60, %64 : vector<8x128xi1>, vector<8x128xf32>
    %cst_27 = arith.constant 5.000000e-01 : f32
    %66 = vector.broadcast %cst_27 : f32 to vector<8x128xf32>
    %67 = arith.mulf %66, %27 : vector<8x128xf32>
    %cst_28 = arith.constant 1.000000e+00 : f32
    %68 = vector.broadcast %cst_28 : f32 to vector<8x128xf32>
    %69 = arith.addf %68, %65 : vector<8x128xf32>
    %70 = arith.mulf %67, %69 : vector<8x128xf32>
    %c0_29 = arith.constant 0 : index
    %c0_30 = arith.constant 0 : index
    %71 = vector.load %arg6[%c0_29, %c0_30] : memref<128x32xf32, #tpu.memory_space<vmem>>, vector<128x32xf32>
    %cst_31 = arith.constant dense<0.000000e+00> : vector<8x32xf32>
    %72 = tpu.matmul %70, %71, %cst_31 {dimension_numbers = #tpu.dot_dimension_numbers<[1], [0], [0], [1], [0, 0, 1, 1], [], []>} : vector<8x128xf32>, vector<128x32xf32>, vector<8x32xf32> -> vector<8x32xf32>
    %c0_32 = arith.constant 0 : index
    %c0_33 = arith.constant 0 : index
    %73 = vector.load %arg7[%c0_32, %c0_33] : memref<1x32xf32, #tpu.memory_space<vmem>>, vector<1x32xf32>
    %74 = vector.broadcast %73 : vector<1x32xf32> to vector<8x32xf32>
    %75 = arith.addf %72, %74 : vector<8x32xf32>
    %c0_34 = arith.constant 0 : index
    %c0_35 = arith.constant 0 : index
    %76 = vector.load %arg8[%c0_34, %c0_35] : memref<8x32xf32, #tpu.memory_space<vmem>>, vector<8x32xf32>
    tpu.vector_store %arg8[%c0_34, %c0_35], %75 {strides = array<i32>} : memref<8x32xf32, #tpu.memory_space<vmem>>, vector<8x32xf32>,
    return
  }
  func.func @transform_0(%arg0: i32) -> (i32, i32) {
    %c0_i32 = arith.constant 0 : i32
    %c0_i32_0 = arith.constant 0 : i32
    return %arg0, %c0_i32 : i32, i32
  }
  func.func @transform_1(%arg0: i32) -> (i32, i32) {
    %c0_i32 = arith.constant 0 : i32
    %c0_i32_0 = arith.constant 0 : i32
    %c0_i32_1 = arith.constant 0 : i32
    return %c0_i32, %c0_i32_0 : i32, i32
  }
  func.func @transform_2(%arg0: i32) -> (i32, i32) {
    %c0_i32 = arith.constant 0 : i32
    %c0_i32_0 = arith.constant 0 : i32
    %c0_i32_1 = arith.constant 0 : i32
    return %c0_i32, %c0_i32_0 : i32, i32
  }
  func.func @transform_3(%arg0: i32) -> (i32, i32) {
    %c0_i32 = arith.constant 0 : i32
    %c0_i32_0 = arith.constant 0 : i32
    %c0_i32_1 = arith.constant 0 : i32
    return %c0_i32, %c0_i32_0 : i32, i32
  }
  func.func @transform_4(%arg0: i32) -> (i32, i32) {
    %c0_i32 = arith.constant 0 : i32
    %c0_i32_0 = arith.constant 0 : i32
    %c0_i32_1 = arith.constant 0 : i32
    return %c0_i32, %c0_i32_0 : i32, i32
  }
  func.func @transform_5(%arg0: i32) -> (i32, i32) {
    %c0_i32 = arith.constant 0 : i32
    %c0_i32_0 = arith.constant 0 : i32
    %c0_i32_1 = arith.constant 0 : i32
    return %c0_i32, %c0_i32_0 : i32, i32
  }
  func.func @transform_6(%arg0: i32) -> (i32, i32) {
    %c0_i32 = arith.constant 0 : i32
    %c0_i32_0 = arith.constant 0 : i32
    %c0_i32_1 = arith.constant 0 : i32
    return %c0_i32, %c0_i32_0 : i32, i32
  }
  func.func @transform_7(%arg0: i32) -> (i32, i32) {
    %c0_i32 = arith.constant 0 : i32
    %c0_i32_0 = arith.constant 0 : i32
    return %arg0, %c0_i32 : i32, i32
  }
}

module attributes {stable_mosaic.version = 11 : i64} {
  func.func @_ff_kernel(%arg0: i32, %arg1: memref<8x32xf32, #tpu.memory_space<vmem>>, %arg2: memref<1x32xf32, #tpu.memory_space<vmem>>, %arg3: memref<1x32xf32, #tpu.memory_space<vmem>>, %arg4: memref<32x128xf32, #tpu.memory_space<vmem>>, %arg5: memref<1x128xf32, #tpu.memory_space<vmem>>, %arg6: memref<128x32xf32, #tpu.memory_space<vmem>>, %arg7: memref<1x32xf32, #tpu.memory_space<vmem>>, %arg8: memref<8x32xf32, #tpu.memory_space<vmem>>) attributes {dimension_semantics = [#tpu.dimension_semantics<parallel>], iteration_bounds = array<i64: 2>, scalar_prefetch = 0 : i64, scratch_operands = 0 : i64, tpu.core_type = #tpu.core_type<tc>, window_params = [{transform_indices = @transform_0, window_bounds = array<i64: 8, 32>}, {pipeline_mode = #tpu.pipeline_mode<synchronous>, transform_indices = @transform_1, window_bounds = array<i64: 1, 32>}, {pipeline_mode = #tpu.pipeline_mode<synchronous>, transform_indices = @transform_2, window_bounds = array<i64: 1, 32>}, {pipeline_mode = #tpu.pipeline_mode<synchronous>, transform_indices = @transform_3, window_bounds = array<i64: 32, 128>}, {pipeline_mode = #tpu.pipeline_mode<synchronous>, transform_indices = @transform_4, window_bounds = array<i64: 1, 128>}, {pipeline_mode = #tpu.pipeline_mode<synchronous>, transform_indices = @transform_5, window_bounds = array<i64: 128, 32>}, {pipeline_mode = #tpu.pipeline_mode<synchronous>, transform_indices = @transform_6, window_bounds = array<i64: 1, 32>}, {transform_indices = @transform_7, window_bounds = array<i64: 8, 32>}]} {
    %c0 = arith.constant 0 : index
    %c0_0 = arith.constant 0 : index
    %0 = vector.load %arg1[%c0, %c0_0] : memref<8x32xf32, #tpu.memory_space<vmem>>, vector<8x32xf32>
    %cst = arith.constant dense<0.000000e+00> : vector<8xf32>
    %1 = vector.multi_reduction <add>, %0, %cst [1] : vector<8x32xf32> to vector<8xf32>
    %2 = vector.shape_cast %1 : vector<8xf32> to vector<8x1xf32>
    %cst_1 = arith.constant 3.200000e+01 : f32
    %3 = vector.broadcast %cst_1 : f32 to vector<8x1xf32>
    %4 = arith.divf %2, %3 : vector<8x1xf32>
    %5 = vector.broadcast %4 : vector<8x1xf32> to vector<8x32xf32>
    %6 = arith.subf %0, %5 : vector<8x32xf32>
    %7 = arith.mulf %6, %6 : vector<8x32xf32>
    %cst_2 = arith.constant dense<0.000000e+00> : vector<8xf32>
    %8 = vector.multi_reduction <add>, %7, %cst_2 [1] : vector<8x32xf32> to vector<8xf32>
    %9 = vector.shape_cast %8 : vector<8xf32> to vector<8x1xf32>
    %cst_3 = arith.constant 3.200000e+01 : f32
    %10 = vector.broadcast %cst_3 : f32 to vector<8x1xf32>
    %11 = arith.divf %9, %10 : vector<8x1xf32>
    %cst_4 = arith.constant 9.99999974E-6 : f32
    %12 = vector.broadcast %cst_4 : f32 to vector<8x1xf32>
    %13 = arith.addf %11, %12 : vector<8x1xf32>
    %14 = math.rsqrt %13 : vector<8x1xf32>
    %15 = vector.broadcast %14 : vector<8x1xf32> to vector<8x32xf32>
    %16 = arith.mulf %6, %15 : vector<8x32xf32>
    %c0_5 = arith.constant 0 : index
    %c0_6 = arith.constant 0 : index
    %17 = vector.load %arg2[%c0_5, %c0_6] : memref<1x32xf32, #tpu.memory_space<vmem>>, vector<1x32xf32>
    %18 = vector.broadcast %17 : vector<1x32xf32> to vector<8x32xf32>
    %19 = arith.mulf %16, %18 : vector<8x32xf32>
    %c0_7 = arith.constant 0 : index
    %c0_8 = arith.constant 0 : index
    %20 = vector.load %arg3[%c0_7, %c0_8] : memref<1x32xf32, #tpu.memory_space<vmem>>, vector<1x32xf32>
    %21 = vector.broadcast %20 : vector<1x32xf32> to vector<8x32xf32>
    %22 = arith.addf %19, %21 : vector<8x32xf32>
    %c0_9 = arith.constant 0 : index
    %c0_10 = arith.constant 0 : index
    %23 = vector.load %arg4[%c0_9, %c0_10] : memref<32x128xf32, #tpu.memory_space<vmem>>, vector<32x128xf32>
    %cst_11 = arith.constant dense<0.000000e+00> : vector<8x128xf32>
    %24 = tpu.matmul %22, %23, %cst_11 {dimension_numbers = #tpu.dot_dimension_numbers<[1], [0], [0], [1], [0, 0, 1, 1], [], []>} : vector<8x32xf32>, vector<32x128xf32>, vector<8x128xf32> -> vector<8x128xf32>
    %c0_12 = arith.constant 0 : index
    %c0_13 = arith.constant 0 : index
    %25 = vector.load %arg5[%c0_12, %c0_13] : memref<1x128xf32, #tpu.memory_space<vmem>>, vector<1x128xf32>
    %26 = vector.broadcast %25 : vector<1x128xf32> to vector<8x128xf32>
    %27 = arith.addf %24, %26 : vector<8x128xf32>
    %cst_14 = arith.constant 0.707106769 : f32
    %28 = vector.broadcast %cst_14 : f32 to vector<8x128xf32>
    %29 = arith.mulf %27, %28 : vector<8x128xf32>
    %30 = math.absf %29 : vector<8x128xf32>
    %cst_15 = arith.constant 0.327591091 : f32
    %31 = vector.broadcast %cst_15 : f32 to vector<8x128xf32>
    %32 = arith.mulf %31, %30 : vector<8x128xf32>
    %cst_16 = arith.constant 1.000000e+00 : f32
    %33 = vector.broadcast %cst_16 : f32 to vector<8x128xf32>
    %34 = arith.addf %33, %32 : vector<8x128xf32>
    %35 = tpu.reciprocal %34 {approx = true} : vector<8x128xf32> -> vector<8x128xf32>
    %36 = arith.mulf %34, %35 : vector<8x128xf32>
    %cst_17 = arith.constant 2.000000e+00 : f32
    %37 = vector.broadcast %cst_17 : f32 to vector<8x128xf32>
    %38 = arith.subf %37, %36 : vector<8x128xf32>
    %39 = arith.mulf %35, %38 : vector<8x128xf32>
    %cst_18 = arith.constant 1.06140542 : f32
    %40 = vector.broadcast %cst_18 : f32 to vector<8x128xf32>
    %41 = arith.mulf %40, %39 : vector<8x128xf32>
    %cst_19 = arith.constant 1.45315206 : f32
    %42 = vector.broadcast %cst_19 : f32 to vector<8x128xf32>
    %43 = arith.subf %41, %42 : vector<8x128xf32>
    %44 = arith.mulf %43, %39 : vector<8x128xf32>
    %cst_20 = arith.constant 1.42141378 : f32
    %45 = vector.broadcast %cst_20 : f32 to vector<8x128xf32>
    %46 = arith.addf %44, %45 : vector<8x128xf32>
    %47 = arith.mulf %46, %39 : vector<8x128xf32>
    %cst_21 = arith.constant 0.284496725 : f32
    %48 = vector.broadcast %cst_21 : f32 to vector<8x128xf32>
    %49 = arith.subf %47, %48 : vector<8x128xf32>
    %50 = arith.mulf %49, %39 : vector<8x128xf32>
    %cst_22 = arith.constant 0.254829586 : f32
    %51 = vector.broadcast %cst_22 : f32 to vector<8x128xf32>
    %52 = arith.addf %50, %51 : vector<8x128xf32>
    %53 = arith.mulf %52, %39 : vector<8x128xf32>
    %cst_23 = arith.constant 0.000000e+00 : f32
    %54 = vector.broadcast %cst_23 : f32 to vector<8x128xf32>
    %55 = arith.subf %54, %30 : vector<8x128xf32>
    %56 = arith.mulf %55, %30 : vector<8x128xf32>
    %57 = math.exp %56 : vector<8x128xf32>
    %58 = arith.mulf %53, %57 : vector<8x128xf32>
    %cst_24 = arith.constant 1.000000e+00 : f32
    %59 = vector.broadcast %cst_24 : f32 to vector<8x128xf32>
    %60 = arith.subf %59, %58 : vector<8x128xf32>
    %cst_25 = arith.constant 0.000000e+00 : f32
    %61 = vector.broadcast %cst_25 : f32 to vector<8x128xf32>
    %62 = arith.cmpf oge, %29, %61 : vector<8x128xf32>
    %cst_26 = arith.constant 0.000000e+00 : f32
    %63 = vector.broadcast %cst_26 : f32 to vector<8x128xf32>
    %64 = arith.subf %63, %60 : vector<8x128xf32>
    %65 = arith.select %62, %60, %64 : vector<8x128xi1>, vector<8x128xf32>
    %cst_27 = arith.constant 5.000000e-01 : f32
    %66 = vector.broadcast %cst_27 : f32 to vector<8x128xf32>
    %67 = arith.mulf %66, %27 : vector<8x128xf32>
    %cst_28 = arith.constant 1.000000e+00 : f32
    %68 = vector.broadcast %cst_28 : f32 to vector<8x128xf32>
    %69 = arith.addf %68, %65 : vector<8x128xf32>
    %70 = arith.mulf %67, %69 : vector<8x128xf32>
    %c0_29 = arith.constant 0 : index
    %c0_30 = arith.constant 0 : index
    %71 = vector.load %arg6[%c0_29, %c0_30] : memref<128x32xf32, #tpu.memory_space<vmem>>, vector<128x32xf32>
    %cst_31 = arith.constant dense<0.000000e+00> : vector<8x32xf32>
    %72 = tpu.matmul %70, %71, %cst_31 {dimension_numbers = #tpu.dot_dimension_numbers<[1], [0], [0], [1], [0, 0, 1, 1], [], []>} : vector<8x128xf32>, vector<128x32xf32>, vector<8x32xf32> -> vector<8x32xf32>
    %c0_32 = arith.constant 0 : index
    %c0_33 = arith.constant 0 : index
    %73 = vector.load %arg7[%c0_32, %c0_33] : memref<1x32xf32, #tpu.memory_space<vmem>>, vector<1x32xf32>
    %74 = vector.broadcast %73 : vector<1x32xf32> to vector<8x32xf32>
    %75 = arith.addf %72, %74 : vector<8x32xf32>
    %c0_34 = arith.constant 0 : index
    %c0_35 = arith.constant 0 : index
    %76 = vector.load %arg8[%c0_34, %c0_35] : memref<8x32xf32, #tpu.memory_space<vmem>>, vector<8x32xf32>
    tpu.vector_store %arg8[%c0_34, %c0_35], %75 {strides = array<i32>} : memref<8x32xf32, #tpu.memory_space<vmem>>, vector<8x32xf32>,
    return
  }
  func.func @transform_0(%arg0: i32) -> (i32, i32) {
    %c0_i32 = arith.constant 0 : i32
    %c0_i32_0 = arith.constant 0 : i32
    return %arg0, %c0_i32 : i32, i32
  }
  func.func @transform_1(%arg0: i32) -> (i32, i32) {
    %c0_i32 = arith.constant 0 : i32
    %c0_i32_0 = arith.constant 0 : i32
    %c0_i32_1 = arith.constant 0 : i32
    return %c0_i32, %c0_i32_0 : i32, i32
  }
  func.func @transform_2(%arg0: i32) -> (i32, i32) {
    %c0_i32 = arith.constant 0 : i32
    %c0_i32_0 = arith.constant 0 : i32
    %c0_i32_1 = arith.constant 0 : i32
    return %c0_i32, %c0_i32_0 : i32, i32
  }
  func.func @transform_3(%arg0: i32) -> (i32, i32) {
    %c0_i32 = arith.constant 0 : i32
    %c0_i32_0 = arith.constant 0 : i32
    %c0_i32_1 = arith.constant 0 : i32
    return %c0_i32, %c0_i32_0 : i32, i32
  }
  func.func @transform_4(%arg0: i32) -> (i32, i32) {
    %c0_i32 = arith.constant 0 : i32
    %c0_i32_0 = arith.constant 0 : i32
    %c0_i32_1 = arith.constant 0 : i32
    return %c0_i32, %c0_i32_0 : i32, i32
  }
  func.func @transform_5(%arg0: i32) -> (i32, i32) {
    %c0_i32 = arith.constant 0 : i32
    %c0_i32_0 = arith.constant 0 : i32
    %c0_i32_1 = arith.constant 0 : i32
    return %c0_i32, %c0_i32_0 : i32, i32
  }
  func.func @transform_6(%arg0: i32) -> (i32, i32) {
    %c0_i32 = arith.constant 0 : i32
    %c0_i32_0 = arith.constant 0 : i32
    %c0_i32_1 = arith.constant 0 : i32
    return %c0_i32, %c0_i32_0 : i32, i32
  }
  func.func @transform_7(%arg0: i32) -> (i32, i32) {
    %c0_i32 = arith.constant 0 : i32
    %c0_i32_0 = arith.constant 0 : i32
    return %arg0, %c0_i32 : i32, i32
  }
}

</mosaic_0001>

<llo_original>
// kernel: tpu_custom_call.1
$region0: #{tpu_custom_call.1}
  #allocation0 [shape = 'u32[]', space=smem, size = 0x4, offset = 0x4, fixed_abs, tag = 'smem constant byte address 0x4 - core index']
  #allocation1 [shape = 'u32[72,128]{1,0:T(1,128)}', space=vmem, size = 0x9000, scoped, tag = 'internal scratch']
  %s0 = inlined_call_operand.vmem [shape: f32[16,32], index: 0, kind: input, shape index: {}]
  %s1 = inlined_call_operand.vmem [shape: f32[1,32], index: 1, kind: input, shape index: {}]
  %s2 = inlined_call_operand.vmem [shape: f32[1,32], index: 2, kind: input, shape index: {}]
  %s3 = inlined_call_operand.vmem [shape: f32[32,128], index: 3, kind: input, shape index: {}]
  %s4 = inlined_call_operand.vmem [shape: f32[1,128], index: 4, kind: input, shape index: {}]
  %s5 = inlined_call_operand.vmem [shape: f32[128,32], index: 5, kind: input, shape index: {}]
  %s6 = inlined_call_operand.vmem [shape: f32[1,32], index: 6, kind: input, shape index: {}]
  %s7 = inlined_call_operand.hbm [shape: f32[16,32], index: 7, kind: output, shape index: {}]
  %s8 = sld [smem:[#allocation0]]
  $region61: #{tpu_custom_call.1} parent=0
    _
  %s10 = ssub.s32 1, %s8
  %s11 = scalar_select 0, %s10, %s8
  $region1: #{tpu_custom_call.1} parent=0
    #allocation2 [shape = 'u8[8192]{0}', space=vmem, size = 0x2000, scoped, tag = 'output window, operand 0']
    #allocation3 [shape = 's32[2]{0}', space=sflag, size = 0x8, scoped, tag = 'scoped memory for tpu_custom_call.1']
    %12 = vsyncpa [#allocation3], 0
    %s13 = scalar_lea.sflag [#allocation3], 1
    %14 = vsyncpa %s13, 0
    loop: start=0, step=1, limit=4
    $region2: #{tpu_custom_call.1} parent=1 // loop_pre_header
      _
    $region3: #{tpu_custom_call.1} parent=1 // loop_header
      %s16 = sphi 0, %s20
      %p17 = scmp.ge.s32.totalorder %s16, 4
      %s26 = sphi 0, %s28
      %s29 = sphi 0, %s26
      %s30 = sphi 0, %s29
      %s46 = sphi 0, %s30
      %s50 = sphi 0, %s50
      %s52 = sphi 0, %s50
      %s53 = sphi 0, %s52
      %s67 = sphi 0, %s53
      %s71 = sphi 0, %s71
      %s73 = sphi 0, %s71
      %s74 = sphi 0, %s73
      %s88 = sphi 0, %s74
      %s92 = sphi 0, %s92
      %s94 = sphi 0, %s92
      %s95 = sphi 0, %s94
      %s109 = sphi 0, %s95
      %s113 = sphi 0, %s113
      %s115 = sphi 0, %s113
      %s116 = sphi 0, %s115
      %s130 = sphi 0, %s116
      %s134 = sphi 0, %s134
      %s136 = sphi 0, %s134
      %s137 = sphi 0, %s136
      %s151 = sphi 0, %s137
      %s155 = sphi 0, %s155
      %s157 = sphi 0, %s155
      %s158 = sphi 0, %s157
      %s172 = sphi 0, %s158
      %s178 = sphi 0, %s180
      %s181 = sphi 0, %s178
      %s182 = sphi 0, %s181
      %s198 = sphi 0, %s182
    $region4: #{tpu_custom_call.1} parent=1 // loop_header_branch
      %19 = sbr.rel (%p17) target = $region8
    $region5: #{tpu_custom_call.1} parent=1 // loop_body
      %s21 = ssub.s32 %s16, 1
      %s22 = ssub.s32 %s16, 2
      %s23 = sadd.s32 %s16, 1
      %s24 = ssub.s32 %s16, %s23
      %p25 = scmp.eq.s32.totalorder %s24, 0
      %s27 = sadd.s32 %s26, 1
      %s28 = scalar_select %p25, %s26, %s27
      %p31 = pneg %p25
      %p32 = scmp.eq.s32.totalorder %s16, 1
      %p33 = por %p31, %p32
      %p34 = scmp.ne.s32.totalorder %s26, %s29
      %p35 = scmp.eq.s32.totalorder %s16, 0
      %p36 = por %p34, %p35
      %p37 = scmp.ne.s32.totalorder %s26, %s29
      %p38 = scmp.eq.s32.totalorder %s21, 1
      %p39 = por %p37, %p38
      %p40 = scmp.ne.s32.totalorder %s29, %s30
      %p41 = scmp.eq.s32.totalorder %s21, 0
      %p42 = por %p40, %p41
      %p43 = scmp.ne.s32.totalorder %s29, %s30
      %p44 = scmp.eq.s32.totalorder %s22, 1
      %p45 = por %p43, %p44
      %p47 = scmp.ne.s32.totalorder %s30, %s46
      %p48 = scmp.eq.s32.totalorder %s22, 0
      %p49 = por %p47, %p48
      %s51 = sadd.s32 %s50, 1
      %p54 = scmp.eq.s32.totalorder %s16, 1
      %p55 = scmp.ne.s32.totalorder %s50, %s52
      %p56 = scmp.eq.s32.totalorder %s16, 0
      %p57 = por %p55, %p56
      %p58 = scmp.ne.s32.totalorder %s50, %s52
      %p59 = scmp.eq.s32.totalorder %s21, 1
      %p60 = por %p58, %p59
      %p61 = scmp.ne.s32.totalorder %s52, %s53
      %p62 = scmp.eq.s32.totalorder %s21, 0
      %p63 = por %p61, %p62
      %p64 = scmp.ne.s32.totalorder %s52, %s53
      %p65 = scmp.eq.s32.totalorder %s22, 1
      %p66 = por %p64, %p65
      %p68 = scmp.ne.s32.totalorder %s53, %s67
      %p69 = scmp.eq.s32.totalorder %s22, 0
      %p70 = por %p68, %p69
      %s72 = sadd.s32 %s71, 1
      %p75 = scmp.eq.s32.totalorder %s16, 1
      %p76 = scmp.ne.s32.totalorder %s71, %s73
      %p77 = scmp.eq.s32.totalorder %s16, 0
      %p78 = por %p76, %p77
      %p79 = scmp.ne.s32.totalorder %s71, %s73
      %p80 = scmp.eq.s32.totalorder %s21, 1
      %p81 = por %p79, %p80
      %p82 = scmp.ne.s32.totalorder %s73, %s74
      %p83 = scmp.eq.s32.totalorder %s21, 0
      %p84 = por %p82, %p83
      %p85 = scmp.ne.s32.totalorder %s73, %s74
      %p86 = scmp.eq.s32.totalorder %s22, 1
      %p87 = por %p85, %p86
      %p89 = scmp.ne.s32.totalorder %s74, %s88
      %p90 = scmp.eq.s32.totalorder %s22, 0
      %p91 = por %p89, %p90
      %s93 = sadd.s32 %s92, 1
      %p96 = scmp.eq.s32.totalorder %s16, 1
      %p97 = scmp.ne.s32.totalorder %s92, %s94
      %p98 = scmp.eq.s32.totalorder %s16, 0
      %p99 = por %p97, %p98
      %p100 = scmp.ne.s32.totalorder %s92, %s94
      %p101 = scmp.eq.s32.totalorder %s21, 1
      %p102 = por %p100, %p101
      %p103 = scmp.ne.s32.totalorder %s94, %s95
      %p104 = scmp.eq.s32.totalorder %s21, 0
      %p105 = por %p103, %p104
      %p106 = scmp.ne.s32.totalorder %s94, %s95
      %p107 = scmp.eq.s32.totalorder %s22, 1
      %p108 = por %p106, %p107
      %p110 = scmp.ne.s32.totalorder %s95, %s109
      %p111 = scmp.eq.s32.totalorder %s22, 0
      %p112 = por %p110, %p111
      %s114 = sadd.s32 %s113, 1
      %p117 = scmp.eq.s32.totalorder %s16, 1
      %p118 = scmp.ne.s32.totalorder %s113, %s115
      %p119 = scmp.eq.s32.totalorder %s16, 0
      %p120 = por %p118, %p119
      %p121 = scmp.ne.s32.totalorder %s113, %s115
      %p122 = scmp.eq.s32.totalorder %s21, 1
      %p123 = por %p121, %p122
      %p124 = scmp.ne.s32.totalorder %s115, %s116
      %p125 = scmp.eq.s32.totalorder %s21, 0
      %p126 = por %p124, %p125
      %p127 = scmp.ne.s32.totalorder %s115, %s116
      %p128 = scmp.eq.s32.totalorder %s22, 1
      %p129 = por %p127, %p128
      %p131 = scmp.ne.s32.totalorder %s116, %s130
      %p132 = scmp.eq.s32.totalorder %s22, 0
      %p133 = por %p131, %p132
      %s135 = sadd.s32 %s134, 1
      %p138 = scmp.eq.s32.totalorder %s16, 1
      %p139 = scmp.ne.s32.totalorder %s134, %s136
      %p140 = scmp.eq.s32.totalorder %s16, 0
      %p141 = por %p139, %p140
      %p142 = scmp.ne.s32.totalorder %s134, %s136
      %p143 = scmp.eq.s32.totalorder %s21, 1
      %p144 = por %p142, %p143
      %p145 = scmp.ne.s32.totalorder %s136, %s137
      %p146 = scmp.eq.s32.totalorder %s21, 0
      %p147 = por %p145, %p146
      %p148 = scmp.ne.s32.totalorder %s136, %s137
      %p149 = scmp.eq.s32.totalorder %s22, 1
      %p150 = por %p148, %p149
      %p152 = scmp.ne.s32.totalorder %s137, %s151
      %p153 = scmp.eq.s32.totalorder %s22, 0
      %p154 = por %p152, %p153
      %s156 = sadd.s32 %s155, 1
      %p159 = scmp.eq.s32.totalorder %s16, 1
      %p160 = scmp.ne.s32.totalorder %s155, %s157
      %p161 = scmp.eq.s32.totalorder %s16, 0
      %p162 = por %p160, %p161
      %p163 = scmp.ne.s32.totalorder %s155, %s157
      %p164 = scmp.eq.s32.totalorder %s21, 1
      %p165 = por %p163, %p164
      %p166 = scmp.ne.s32.totalorder %s157, %s158
      %p167 = scmp.eq.s32.totalorder %s21, 0
      %p168 = por %p166, %p167
      %p169 = scmp.ne.s32.totalorder %s157, %s158
      %p170 = scmp.eq.s32.totalorder %s22, 1
      %p171 = por %p169, %p170
      %p173 = scmp.ne.s32.totalorder %s158, %s172
      %p174 = scmp.eq.s32.totalorder %s22, 0
      %p175 = por %p173, %p174
      %s176 = ssub.s32 %s16, %s23
      %p177 = scmp.eq.s32.totalorder %s176, 0
      %s179 = sadd.s32 %s178, 1
      %s180 = scalar_select %p177, %s178, %s179
      %p183 = pneg %p177
      %p184 = scmp.eq.s32.totalorder %s16, 1
      %p185 = por %p183, %p184
      %p186 = scmp.ne.s32.totalorder %s178, %s181
      %p187 = scmp.eq.s32.totalorder %s16, 0
      %p188 = por %p186, %p187
      %p189 = scmp.ne.s32.totalorder %s178, %s181
      %p190 = scmp.eq.s32.totalorder %s21, 1
      %p191 = por %p189, %p190
      %p192 = scmp.ne.s32.totalorder %s181, %s182
      %p193 = scmp.eq.s32.totalorder %s21, 0
      %p194 = por %p192, %p193
      %p195 = scmp.ne.s32.totalorder %s181, %s182
      %p196 = scmp.eq.s32.totalorder %s22, 1
      %p197 = por %p195, %p196
      %p199 = scmp.ne.s32.totalorder %s182, %s198
      %p200 = scmp.eq.s32.totalorder %s22, 0
      %p201 = por %p199, %p200
      %p202 = scmp.le.s32.totalorder 1, %s16
      %p203 = scmp.lt.s32.totalorder %s16, 3
      %p204 = pnand %p202, %p203
      %p205 = pneg %p204
      // Predicated region
      $region9: #{tpu_custom_call.1} parent=5 // pred_check
        _
      $region10: #{tpu_custom_call.1} parent=5 // pred_check_branch
        %207 = sbr.rel (%p204) target = $region12
      $region11: #{tpu_custom_call.1} parent=5 // pred_region
        %s208 = ssub.s32 %s16, 1
        // Predicated region
        $region13: #{tpu_custom_call.1} parent=11 // pred_check
          %p209 = pneg %p63
        $region14: #{tpu_custom_call.1} parent=11 // pred_check_branch
          %211 = sbr.rel (%p209) target = $region16
        $region15: #{tpu_custom_call.1} parent=11 // pred_region
          _
        $region16: #{tpu_custom_call.1} parent=11 // pred_fallthru
          _
        // Predicated region
        $region17: #{tpu_custom_call.1} parent=11 // pred_check
          %p212 = pneg %p84
        $region18: #{tpu_custom_call.1} parent=11 // pred_check_branch
          %214 = sbr.rel (%p212) target = $region20
        $region19: #{tpu_custom_call.1} parent=11 // pred_region
          _
        $region20: #{tpu_custom_call.1} parent=11 // pred_fallthru
          _
        // Predicated region
        $region21: #{tpu_custom_call.1} parent=11 // pred_check
          %p215 = pneg %p105
        $region22: #{tpu_custom_call.1} parent=11 // pred_check_branch
          %217 = sbr.rel (%p215) target = $region24
        $region23: #{tpu_custom_call.1} parent=11 // pred_region
          _
        $region24: #{tpu_custom_call.1} parent=11 // pred_fallthru
          _
        // Predicated region
        $region25: #{tpu_custom_call.1} parent=11 // pred_check
          %p218 = pneg %p126
        $region26: #{tpu_custom_call.1} parent=11 // pred_check_branch
          %220 = sbr.rel (%p218) target = $region28
        $region27: #{tpu_custom_call.1} parent=11 // pred_region
          _
        $region28: #{tpu_custom_call.1} parent=11 // pred_fallthru
          _
        // Predicated region
        $region29: #{tpu_custom_call.1} parent=11 // pred_check
          %p221 = pneg %p147
        $region30: #{tpu_custom_call.1} parent=11 // pred_check_branch
          %223 = sbr.rel (%p221) target = $region32
        $region31: #{tpu_custom_call.1} parent=11 // pred_region
          _
        $region32: #{tpu_custom_call.1} parent=11 // pred_fallthru
          _
        // Predicated region
        $region33: #{tpu_custom_call.1} parent=11 // pred_check
          %p224 = pneg %p168
        $region34: #{tpu_custom_call.1} parent=11 // pred_check_branch
          %226 = sbr.rel (%p224) target = $region36
        $region35: #{tpu_custom_call.1} parent=11 // pred_region
          _
        $region36: #{tpu_custom_call.1} parent=11 // pred_fallthru
          _
      $region12: #{tpu_custom_call.1} parent=5 // pred_fallthru
        _
      %p227 = scmp.lt.s32.totalorder %s16, 2
      // Predicated region
      $region37: #{tpu_custom_call.1} parent=5 // pred_check
        %p228 = pneg %p227
      $region38: #{tpu_custom_call.1} parent=5 // pred_check_branch
        %230 = sbr.rel (%p228) target = $region40
      $region39: #{tpu_custom_call.1} parent=5 // pred_region
        // Predicated region
        $region41: #{tpu_custom_call.1} parent=39 // pred_check
          %p231 = pneg %p36
        $region42: #{tpu_custom_call.1} parent=39 // pred_check_branch
          %233 = sbr.rel (%p231) target = $region44
        $region43: #{tpu_custom_call.1} parent=39 // pred_region
          %p234 = scmp.lt.s32.totalorder %s16, 1
          %s235 = scalar_select %p234, %s16, 1
          %s236 = smul.addr %s235, 8
          %s237 = scalar_lea.vmem %s0, %s236
        $region44: #{tpu_custom_call.1} parent=39 // pred_fallthru
          _
      $region40: #{tpu_custom_call.1} parent=5 // pred_fallthru
        _
      %p238 = scmp.le.s32.totalorder 1, %s16
      %p239 = scmp.lt.s32.totalorder %s16, 3
      %p240 = pnand %p238, %p239
      %p241 = pneg %p240
      // Predicated region
      $region45: #{tpu_custom_call.1} parent=5 // pred_check
        _
      $region46: #{tpu_custom_call.1} parent=5 // pred_check_branch
        %243 = sbr.rel (%p240) target = $region48
      $region47: #{tpu_custom_call.1} parent=5 // pred_region
        %s244 = ssub.s32 %s16, 1
        %p245 = scmp.lt.s32.totalorder %s21, 1
        %s246 = scalar_select %p245, %s21, 1
        %s247 = smul.addr %s246, 8
        %s248 = scalar_lea.vmem %s0, %s247
        %p249 = pneg %p42
        %p250 = pneg %p39
        %p251 = pneg %p63
        %p252 = pneg %p60
        %p253 = pneg %p84
        %p254 = pneg %p81
        %p255 = pneg %p105
        %p256 = pneg %p102
        %p257 = pneg %p126
        %p258 = pneg %p123
        %p259 = pneg %p147
        %p260 = pneg %p144
        %p261 = pneg %p168
        %p262 = pneg %p165
        %p263 = pneg %p194
        %p264 = pneg %p191
        %s265 = sand.u32 %s181, 1
        %s266 = scalar_lea.sflag [#allocation3], %s265
        %s267 = sand.u32 %s181, 1
        %s268 = smul.addr %s267, 8
        %s269 = scalar_lea.vmem [#allocation2], %s268
        %p270 = scmp.lt.s32.totalorder %s21, 1
        %s271 = scalar_select %p270, %s21, 1
        %s272 = smul.addr %s271, 8
        %s273 = scalar_lea.vmem %s0, %s272
        %v274 = vld [vmem:[%s273] sm:$0xff]
        %vm275 = vcmask 261120
        %v276 = vsel %vm275, %v274, 0.0
        %277 = vadd.xlane.f32.xlu0 %v276
        %v278 = vpop.xlane.xlu0 %277
        %v279 = vrcp.pop 32.0
        %v280 = vmul.f32 32.0, %v279
        %v281 = vsub.f32 1.0, %v280
        %v282 = vmul.f32 %v279, %v281
        %v283 = vadd.f32 %v279, %v282
        %vm284 = vweird.f32 %v279
        %v285 = vsel %vm284, %v279, %v283
        %v286 = vmul.f32 %v278, %v285
        %v287 = vsub.f32 %v274, %v286
        %v288 = vmul.f32 %v287, %v287
        %v289 = vsel %vm275, %v288, 0.0
        %290 = vadd.xlane.f32.xlu0 %v289
        %v291 = vpop.xlane.xlu0 %290
        %v292 = vmul.f32 %v291, %v285
        %v293 = vadd.f32 %v292, 1e-05
        %v294 = vrsqrt.pop %v293
        %v295 = vmul.f32 %v294, %v293
        %v296 = vmul.f32 %v295, %v294
        %v297 = vmul.f32 0.5, %v296
        %v298 = vsub.f32 1.5, %v297
        %v299 = vmul.f32 %v294, %v298
        %vm300 = vweird.f32 %v293
        %vm301 = vweird.f32 %v294
        %vm302 = vmor %vm300, %vm301
        %v303 = vsel %vm302, %v294, %v299
        %v304 = vmul.f32 %v287, %v303
        %v305 = vld [vmem:[%s1] sm:$0x1]
        %v307 = vperm.slane %v305, 0
        %v309 = vmul.f32 %v304, %v307
        %v310 = vld [vmem:[%s2] sm:$0x1]
        %v312 = vperm.slane %v310, 0
        %v314 = vadd.f32 %v309, %v312
        %v315 = vld [vmem:[%s3] sm:$0xff]
        %v316 = vld [vmem:[%s3 + $0x8] sm:$0xff]
        %v317 = vld [vmem:[%s3 + $0x10] sm:$0xff]
        %v318 = vld [vmem:[%s3 + $0x18] sm:$0xff]
        %v319 = vld [vmem:[%s4] sm:$0x1]
        %v321 = vperm.slane %v319, 0
        %v324 = vsel %vm275, %v314, 0
        %326 = vmatpush.msra.mxu0 0.0
        %327 = vmatpush.msra.mxu0 0.0
        %328 = vmatpush.msra.mxu0 0.0
        %329 = vmatpush.msra.mxu0 0.0
        %330 = vmatpush.msra.mxu0 0.0
        %331 = vmatpush.msra.mxu0 0.0
        %332 = vmatpush.msra.mxu0 0.0
        %333 = vmatpush.msra.mxu0 0.0
        %334 = vmatpush.msra.mxu0 0.0
        %335 = vmatpush.msra.mxu0 0.0
        %336 = vmatpush.msra.mxu0 0.0
        %337 = vmatpush.msra.mxu0 0.0
        %338 = vmatpush.msra.mxu0 %v318
        %339 = vmatpush.msra.mxu0 %v317
        %340 = vmatpush.msra.mxu0 %v316
        %341 = vmatpush.msra.mxu0 %v315
        %342 = vmatmul.f32.gmra.mxu0 %v324
        %v343 = vpop.f32.mrf.mxu0
        %v344 = vadd.f32 %v321, %v343
        %345 = vdwg.mxu0
        %v346 = vmul.f32 %v344, 0.70710677
        %v347 = vand.u32 2147483647, %v346
        %v348 = vmul.f32 %v347, 0.3275911
        %v349 = vadd.f32 %v348, 1.0
        %v350 = vrcp.pop %v349
        %v351 = vmul.f32 %v349, %v350
        %v352 = vsub.f32 2.0, %v351
        %v353 = vmul.f32 %v350, %v352
        %v354 = vmul.f32 %v353, 1.0614054
        %v355 = vsub.f32 %v354, 1.4531521
        %v356 = vmul.f32 %v355, %v353
        %v357 = vadd.f32 %v356, 1.4214138
        %v358 = vmul.f32 %v357, %v353
        %v359 = vsub.f32 %v358, 0.28449672
        %v360 = vmul.f32 %v359, %v353
        %v361 = vadd.f32 %v360, 0.2548296
        %v362 = vmul.f32 %v361, %v353
        %v363 = vsub.f32 0.0, %v347
        %v364 = vmul.f32 %v363, %v347
        %v365 = vmul.f32 %v364, 1.442695
        %v366 = vpow.pop %v365
        %v367 = vmul.f32 %v362, %v366
        %v368 = vsub.f32 1.0, %v367
        %vm369 = vcmp.ge.f32.partialorder %v346, 0.0
        %v370 = vsub.f32 0.0, %v368
        %v371 = vsel %vm369, %v368, %v370
        %v372 = vmul.f32 %v344, 0.5
        %v373 = vadd.f32 %v371, 1.0
        %v374 = vmul.f32 %v372, %v373
        %v375 = vld [vmem:[%s5] sm:$0xff]
        %v376 = vld [vmem:[%s5 + $0x8] sm:$0xff]
        %v377 = vld [vmem:[%s5 + $0x10] sm:$0xff]
        %v378 = vld [vmem:[%s5 + $0x18] sm:$0xff]
        %v379 = vld [vmem:[%s5 + $0x20] sm:$0xff]
        %v380 = vld [vmem:[%s5 + $0x28] sm:$0xff]
        %v381 = vld [vmem:[%s5 + $0x30] sm:$0xff]
        %v382 = vld [vmem:[%s5 + $0x38] sm:$0xff]
        %v383 = vld [vmem:[%s5 + $0x40] sm:$0xff]
        %v384 = vld [vmem:[%s5 + $0x48] sm:$0xff]
        %v385 = vld [vmem:[%s5 + $0x50] sm:$0xff]
        %v386 = vld [vmem:[%s5 + $0x58] sm:$0xff]
        %v387 = vld [vmem:[%s5 + $0x60] sm:$0xff]
        %v388 = vld [vmem:[%s5 + $0x68] sm:$0xff]
        %v389 = vld [vmem:[%s5 + $0x70] sm:$0xff]
        %v390 = vld [vmem:[%s5 + $0x78] sm:$0xff]
        %v391 = vld [vmem:[%s6] sm:$0x1]
        %v393 = vperm.slane %v391, 0
        %395 = vmatpush.msra.mxu0 %v390
        %396 = vmatpush.msra.mxu0 %v389
        %397 = vmatpush.msra.mxu0 %v388
        %398 = vmatpush.msra.mxu0 %v387
        %399 = vmatpush.msra.mxu0 %v386
        %400 = vmatpush.msra.mxu0 %v385
        %401 = vmatpush.msra.mxu0 %v384
        %402 = vmatpush.msra.mxu0 %v383
        %403 = vmatpush.msra.mxu0 %v382
        %404 = vmatpush.msra.mxu0 %v381
        %405 = vmatpush.msra.mxu0 %v380
        %406 = vmatpush.msra.mxu0 %v379
        %407 = vmatpush.msra.mxu0 %v378
        %408 = vmatpush.msra.mxu0 %v377
        %409 = vmatpush.msra.mxu0 %v376
        %410 = vmatpush.msra.mxu0 %v375
        %411 = vmatmul.f32.gmra.mxu0 %v374
        %v412 = vpop.f32.mrf.mxu0
        %v413 = vadd.f32 %v393, %v412
        %414 = vdwg.mxu0
        %415 = vst.msk [vmem:[%s269] sm:$0xff] %vm275, %v413
        %s416 = sand.u32 %s181, 1
        %s417 = scalar_lea.sflag [#allocation3], %s416
        %s418 = sand.u32 %s181, 1
        %s419 = smul.addr %s418, 8
        %s420 = scalar_lea.vmem [#allocation2], %s419
        // Predicated region
        $region49: #{tpu_custom_call.1} parent=47 // pred_check
          %p421 = pneg %p191
        $region50: #{tpu_custom_call.1} parent=47 // pred_check_branch
          %423 = sbr.rel (%p421) target = $region52
        $region51: #{tpu_custom_call.1} parent=47 // pred_region
          %425 = vsyncadd %s417, 0
          %s426 = smul.addr %s21, 8
          %s427 = scalar_lea.hbm %s7, %s426
          %s429 = sshll.u32 %s420, 4
          %s430 = int_to_ptr.vmem [resolvable:$true] %s429
          %s431 = sshll.u32 %s427, 4
          %s432 = int_to_ptr.hbm [resolvable:$true] %s431
          %434 = dma.vmem_to_hbm [thread:$0]  %s430, 128, %s432, %s417
        $region52: #{tpu_custom_call.1} parent=47 // pred_fallthru
          _
      $region48: #{tpu_custom_call.1} parent=5 // pred_fallthru
        _
      %p435 = scmp.le.s32.totalorder 2, %s16
      // Predicated region
      $region53: #{tpu_custom_call.1} parent=5 // pred_check
        %p436 = pneg %p435
      $region54: #{tpu_custom_call.1} parent=5 // pred_check_branch
        %438 = sbr.rel (%p436) target = $region56
      $region55: #{tpu_custom_call.1} parent=5 // pred_region
        %s439 = ssub.s32 %s16, 2
        // Predicated region
        $region57: #{tpu_custom_call.1} parent=55 // pred_check
          %p440 = pneg %p197
        $region58: #{tpu_custom_call.1} parent=55 // pred_check_branch
          %442 = sbr.rel (%p440) target = $region60
        $region59: #{tpu_custom_call.1} parent=55 // pred_region
          %s443 = sand.u32 %s182, 1
          %s444 = scalar_lea.sflag [#allocation3], %s443
          %s445 = sand.u32 %s182, 1
          %s446 = smul.addr %s445, 8
          %s447 = scalar_lea.vmem [#allocation2], %s446
          %449 = dma.done %s444, 128
        $region60: #{tpu_custom_call.1} parent=55 // pred_fallthru
          _
      $region56: #{tpu_custom_call.1} parent=5 // pred_fallthru
        _
    $region6: #{tpu_custom_call.1} parent=1 // loop_footer
      %s20 = sadd.s32 1, %s16
    $region7: #{tpu_custom_call.1} parent=1 // loop_footer_branch
      %15 = sbr.rel target = $region3
    $region8: #{tpu_custom_call.1} parent=1 // loop_exit
      _
    %450 = vsyncpa [#allocation3], 1
    %s451 = scalar_lea.sflag [#allocation3], 1
    %452 = vsyncpa %s451, 1

// kernel: tpu_custom_call.1
$region0: #{tpu_custom_call.1}
  #allocation0 [shape = 'u32[]', space=smem, size = 0x4, offset = 0x4, fixed_abs, tag = 'smem constant byte address 0x4 - core index']
  #allocation1 [shape = 'u32[72,128]{1,0:T(1,128)}', space=vmem, size = 0x9000, scoped, tag = 'internal scratch']
  %s0 = inlined_call_operand.vmem [shape: f32[16,32], index: 0, kind: input, shape index: {}]
  %s1 = inlined_call_operand.vmem [shape: f32[1,32], index: 1, kind: input, shape index: {}]
  %s2 = inlined_call_operand.vmem [shape: f32[1,32], index: 2, kind: input, shape index: {}]
  %s3 = inlined_call_operand.vmem [shape: f32[32,128], index: 3, kind: input, shape index: {}]
  %s4 = inlined_call_operand.vmem [shape: f32[1,128], index: 4, kind: input, shape index: {}]
  %s5 = inlined_call_operand.vmem [shape: f32[128,32], index: 5, kind: input, shape index: {}]
  %s6 = inlined_call_operand.vmem [shape: f32[1,32], index: 6, kind: input, shape index: {}]
  %s7 = inlined_call_operand.hbm [shape: f32[16,32], index: 7, kind: output, shape index: {}]
  %s8 = sld [smem:[#allocation0]]
  $region61: #{tpu_custom_call.1} parent=0
    _
  %s10 = ssub.s32 1, %s8
  %s11 = scalar_select 0, %s10, %s8
  $region1: #{tpu_custom_call.1} parent=0
    #allocation2 [shape = 'u8[8192]{0}', space=vmem, size = 0x2000, scoped, tag = 'output window, operand 0']
    #allocation3 [shape = 's32[2]{0}', space=sflag, size = 0x8, scoped, tag = 'scoped memory for tpu_custom_call.1']
    %12 = vsyncpa [#allocation3], 0
    %s13 = scalar_lea.sflag [#allocation3], 1
    %14 = vsyncpa %s13, 0
    loop: start=0, step=1, limit=4
    $region2: #{tpu_custom_call.1} parent=1 // loop_pre_header
      _
    $region3: #{tpu_custom_call.1} parent=1 // loop_header
      %s16 = sphi 0, %s20
      %p17 = scmp.ge.s32.totalorder %s16, 4
      %s26 = sphi 0, %s28
      %s29 = sphi 0, %s26
      %s30 = sphi 0, %s29
      %s46 = sphi 0, %s30
      %s50 = sphi 0, %s50
      %s52 = sphi 0, %s50
      %s53 = sphi 0, %s52
      %s67 = sphi 0, %s53
      %s71 = sphi 0, %s71
      %s73 = sphi 0, %s71
      %s74 = sphi 0, %s73
      %s88 = sphi 0, %s74
      %s92 = sphi 0, %s92
      %s94 = sphi 0, %s92
      %s95 = sphi 0, %s94
      %s109 = sphi 0, %s95
      %s113 = sphi 0, %s113
      %s115 = sphi 0, %s113
      %s116 = sphi 0, %s115
      %s130 = sphi 0, %s116
      %s134 = sphi 0, %s134
      %s136 = sphi 0, %s134
      %s137 = sphi 0, %s136
      %s151 = sphi 0, %s137
      %s155 = sphi 0, %s155
      %s157 = sphi 0, %s155
      %s158 = sphi 0, %s157
      %s172 = sphi 0, %s158
      %s178 = sphi 0, %s180
      %s181 = sphi 0, %s178
      %s182 = sphi 0, %s181
      %s198 = sphi 0, %s182
    $region4: #{tpu_custom_call.1} parent=1 // loop_header_branch
      %19 = sbr.rel (%p17) target = $region8
    $region5: #{tpu_custom_call.1} parent=1 // loop_body
      %s21 = ssub.s32 %s16, 1
      %s22 = ssub.s32 %s16, 2
      %s23 = sadd.s32 %s16, 1
      %s24 = ssub.s32 %s16, %s23
      %p25 = scmp.eq.s32.totalorder %s24, 0
      %s27 = sadd.s32 %s26, 1
      %s28 = scalar_select %p25, %s26, %s27
      %p31 = pneg %p25
      %p32 = scmp.eq.s32.totalorder %s16, 1
      %p33 = por %p31, %p32
      %p34 = scmp.ne.s32.totalorder %s26, %s29
      %p35 = scmp.eq.s32.totalorder %s16, 0
      %p36 = por %p34, %p35
      %p37 = scmp.ne.s32.totalorder %s26, %s29
      %p38 = scmp.eq.s32.totalorder %s21, 1
      %p39 = por %p37, %p38
      %p40 = scmp.ne.s32.totalorder %s29, %s30
      %p41 = scmp.eq.s32.totalorder %s21, 0
      %p42 = por %p40, %p41
      %p43 = scmp.ne.s32.totalorder %s29, %s30
      %p44 = scmp.eq.s32.totalorder %s22, 1
      %p45 = por %p43, %p44
      %p47 = scmp.ne.s32.totalorder %s30, %s46
      %p48 = scmp.eq.s32.totalorder %s22, 0
      %p49 = por %p47, %p48
      %s51 = sadd.s32 %s50, 1
      %p54 = scmp.eq.s32.totalorder %s16, 1
      %p55 = scmp.ne.s32.totalorder %s50, %s52
      %p56 = scmp.eq.s32.totalorder %s16, 0
      %p57 = por %p55, %p56
      %p58 = scmp.ne.s32.totalorder %s50, %s52
      %p59 = scmp.eq.s32.totalorder %s21, 1
      %p60 = por %p58, %p59
      %p61 = scmp.ne.s32.totalorder %s52, %s53
      %p62 = scmp.eq.s32.totalorder %s21, 0
      %p63 = por %p61, %p62
      %p64 = scmp.ne.s32.totalorder %s52, %s53
      %p65 = scmp.eq.s32.totalorder %s22, 1
      %p66 = por %p64, %p65
      %p68 = scmp.ne.s32.totalorder %s53, %s67
      %p69 = scmp.eq.s32.totalorder %s22, 0
      %p70 = por %p68, %p69
      %s72 = sadd.s32 %s71, 1
      %p75 = scmp.eq.s32.totalorder %s16, 1
      %p76 = scmp.ne.s32.totalorder %s71, %s73
      %p77 = scmp.eq.s32.totalorder %s16, 0
      %p78 = por %p76, %p77
      %p79 = scmp.ne.s32.totalorder %s71, %s73
      %p80 = scmp.eq.s32.totalorder %s21, 1
      %p81 = por %p79, %p80
      %p82 = scmp.ne.s32.totalorder %s73, %s74
      %p83 = scmp.eq.s32.totalorder %s21, 0
      %p84 = por %p82, %p83
      %p85 = scmp.ne.s32.totalorder %s73, %s74
      %p86 = scmp.eq.s32.totalorder %s22, 1
      %p87 = por %p85, %p86
      %p89 = scmp.ne.s32.totalorder %s74, %s88
      %p90 = scmp.eq.s32.totalorder %s22, 0
      %p91 = por %p89, %p90
      %s93 = sadd.s32 %s92, 1
      %p96 = scmp.eq.s32.totalorder %s16, 1
      %p97 = scmp.ne.s32.totalorder %s92, %s94
      %p98 = scmp.eq.s32.totalorder %s16, 0
      %p99 = por %p97, %p98
      %p100 = scmp.ne.s32.totalorder %s92, %s94
      %p101 = scmp.eq.s32.totalorder %s21, 1
      %p102 = por %p100, %p101
      %p103 = scmp.ne.s32.totalorder %s94, %s95
      %p104 = scmp.eq.s32.totalorder %s21, 0
      %p105 = por %p103, %p104
      %p106 = scmp.ne.s32.totalorder %s94, %s95
      %p107 = scmp.eq.s32.totalorder %s22, 1
      %p108 = por %p106, %p107
      %p110 = scmp.ne.s32.totalorder %s95, %s109
      %p111 = scmp.eq.s32.totalorder %s22, 0
      %p112 = por %p110, %p111
      %s114 = sadd.s32 %s113, 1
      %p117 = scmp.eq.s32.totalorder %s16, 1
      %p118 = scmp.ne.s32.totalorder %s113, %s115
      %p119 = scmp.eq.s32.totalorder %s16, 0
      %p120 = por %p118, %p119
      %p121 = scmp.ne.s32.totalorder %s113, %s115
      %p122 = scmp.eq.s32.totalorder %s21, 1
      %p123 = por %p121, %p122
      %p124 = scmp.ne.s32.totalorder %s115, %s116
      %p125 = scmp.eq.s32.totalorder %s21, 0
      %p126 = por %p124, %p125
      %p127 = scmp.ne.s32.totalorder %s115, %s116
      %p128 = scmp.eq.s32.totalorder %s22, 1
      %p129 = por %p127, %p128
      %p131 = scmp.ne.s32.totalorder %s116, %s130
      %p132 = scmp.eq.s32.totalorder %s22, 0
      %p133 = por %p131, %p132
      %s135 = sadd.s32 %s134, 1
      %p138 = scmp.eq.s32.totalorder %s16, 1
      %p139 = scmp.ne.s32.totalorder %s134, %s136
      %p140 = scmp.eq.s32.totalorder %s16, 0
      %p141 = por %p139, %p140
      %p142 = scmp.ne.s32.totalorder %s134, %s136
      %p143 = scmp.eq.s32.totalorder %s21, 1
      %p144 = por %p142, %p143
      %p145 = scmp.ne.s32.totalorder %s136, %s137
      %p146 = scmp.eq.s32.totalorder %s21, 0
      %p147 = por %p145, %p146
      %p148 = scmp.ne.s32.totalorder %s136, %s137
      %p149 = scmp.eq.s32.totalorder %s22, 1
      %p150 = por %p148, %p149
      %p152 = scmp.ne.s32.totalorder %s137, %s151
      %p153 = scmp.eq.s32.totalorder %s22, 0
      %p154 = por %p152, %p153
      %s156 = sadd.s32 %s155, 1
      %p159 = scmp.eq.s32.totalorder %s16, 1
      %p160 = scmp.ne.s32.totalorder %s155, %s157
      %p161 = scmp.eq.s32.totalorder %s16, 0
      %p162 = por %p160, %p161
      %p163 = scmp.ne.s32.totalorder %s155, %s157
      %p164 = scmp.eq.s32.totalorder %s21, 1
      %p165 = por %p163, %p164
      %p166 = scmp.ne.s32.totalorder %s157, %s158
      %p167 = scmp.eq.s32.totalorder %s21, 0
      %p168 = por %p166, %p167
      %p169 = scmp.ne.s32.totalorder %s157, %s158
      %p170 = scmp.eq.s32.totalorder %s22, 1
      %p171 = por %p169, %p170
      %p173 = scmp.ne.s32.totalorder %s158, %s172
      %p174 = scmp.eq.s32.totalorder %s22, 0
      %p175 = por %p173, %p174
      %s176 = ssub.s32 %s16, %s23
      %p177 = scmp.eq.s32.totalorder %s176, 0
      %s179 = sadd.s32 %s178, 1
      %s180 = scalar_select %p177, %s178, %s179
      %p183 = pneg %p177
      %p184 = scmp.eq.s32.totalorder %s16, 1
      %p185 = por %p183, %p184
      %p186 = scmp.ne.s32.totalorder %s178, %s181
      %p187 = scmp.eq.s32.totalorder %s16, 0
      %p188 = por %p186, %p187
      %p189 = scmp.ne.s32.totalorder %s178, %s181
      %p190 = scmp.eq.s32.totalorder %s21, 1
      %p191 = por %p189, %p190
      %p192 = scmp.ne.s32.totalorder %s181, %s182
      %p193 = scmp.eq.s32.totalorder %s21, 0
      %p194 = por %p192, %p193
      %p195 = scmp.ne.s32.totalorder %s181, %s182
      %p196 = scmp.eq.s32.totalorder %s22, 1
      %p197 = por %p195, %p196
      %p199 = scmp.ne.s32.totalorder %s182, %s198
      %p200 = scmp.eq.s32.totalorder %s22, 0
      %p201 = por %p199, %p200
      %p202 = scmp.le.s32.totalorder 1, %s16
      %p203 = scmp.lt.s32.totalorder %s16, 3
      %p204 = pnand %p202, %p203
      %p205 = pneg %p204
      // Predicated region
      $region9: #{tpu_custom_call.1} parent=5 // pred_check
        _
      $region10: #{tpu_custom_call.1} parent=5 // pred_check_branch
        %207 = sbr.rel (%p204) target = $region12
      $region11: #{tpu_custom_call.1} parent=5 // pred_region
        %s208 = ssub.s32 %s16, 1
        // Predicated region
        $region13: #{tpu_custom_call.1} parent=11 // pred_check
          %p209 = pneg %p63
        $region14: #{tpu_custom_call.1} parent=11 // pred_check_branch
          %211 = sbr.rel (%p209) target = $region16
        $region15: #{tpu_custom_call.1} parent=11 // pred_region
          _
        $region16: #{tpu_custom_call.1} parent=11 // pred_fallthru
          _
        // Predicated region
        $region17: #{tpu_custom_call.1} parent=11 // pred_check
          %p212 = pneg %p84
        $region18: #{tpu_custom_call.1} parent=11 // pred_check_branch
          %214 = sbr.rel (%p212) target = $region20
        $region19: #{tpu_custom_call.1} parent=11 // pred_region
          _
        $region20: #{tpu_custom_call.1} parent=11 // pred_fallthru
          _
        // Predicated region
        $region21: #{tpu_custom_call.1} parent=11 // pred_check
          %p215 = pneg %p105
        $region22: #{tpu_custom_call.1} parent=11 // pred_check_branch
          %217 = sbr.rel (%p215) target = $region24
        $region23: #{tpu_custom_call.1} parent=11 // pred_region
          _
        $region24: #{tpu_custom_call.1} parent=11 // pred_fallthru
          _
        // Predicated region
        $region25: #{tpu_custom_call.1} parent=11 // pred_check
          %p218 = pneg %p126
        $region26: #{tpu_custom_call.1} parent=11 // pred_check_branch
          %220 = sbr.rel (%p218) target = $region28
        $region27: #{tpu_custom_call.1} parent=11 // pred_region
          _
        $region28: #{tpu_custom_call.1} parent=11 // pred_fallthru
          _
        // Predicated region
        $region29: #{tpu_custom_call.1} parent=11 // pred_check
          %p221 = pneg %p147
        $region30: #{tpu_custom_call.1} parent=11 // pred_check_branch
          %223 = sbr.rel (%p221) target = $region32
        $region31: #{tpu_custom_call.1} parent=11 // pred_region
          _
        $region32: #{tpu_custom_call.1} parent=11 // pred_fallthru
          _
        // Predicated region
        $region33: #{tpu_custom_call.1} parent=11 // pred_check
          %p224 = pneg %p168
        $region34: #{tpu_custom_call.1} parent=11 // pred_check_branch
          %226 = sbr.rel (%p224) target = $region36
        $region35: #{tpu_custom_call.1} parent=11 // pred_region
          _
        $region36: #{tpu_custom_call.1} parent=11 // pred_fallthru
          _
      $region12: #{tpu_custom_call.1} parent=5 // pred_fallthru
        _
      %p227 = scmp.lt.s32.totalorder %s16, 2
      // Predicated region
      $region37: #{tpu_custom_call.1} parent=5 // pred_check
        %p228 = pneg %p227
      $region38: #{tpu_custom_call.1} parent=5 // pred_check_branch
        %230 = sbr.rel (%p228) target = $region40
      $region39: #{tpu_custom_call.1} parent=5 // pred_region
        // Predicated region
        $region41: #{tpu_custom_call.1} parent=39 // pred_check
          %p231 = pneg %p36
        $region42: #{tpu_custom_call.1} parent=39 // pred_check_branch
          %233 = sbr.rel (%p231) target = $region44
        $region43: #{tpu_custom_call.1} parent=39 // pred_region
          %p234 = scmp.lt.s32.totalorder %s16, 1
          %s235 = scalar_select %p234, %s16, 1
          %s236 = smul.addr %s235, 8
          %s237 = scalar_lea.vmem %s0, %s236
        $region44: #{tpu_custom_call.1} parent=39 // pred_fallthru
          _
      $region40: #{tpu_custom_call.1} parent=5 // pred_fallthru
        _
      %p238 = scmp.le.s32.totalorder 1, %s16
      %p239 = scmp.lt.s32.totalorder %s16, 3
      %p240 = pnand %p238, %p239
      %p241 = pneg %p240
      // Predicated region
      $region45: #{tpu_custom_call.1} parent=5 // pred_check
        _
      $region46: #{tpu_custom_call.1} parent=5 // pred_check_branch
        %243 = sbr.rel (%p240) target = $region48
      $region47: #{tpu_custom_call.1} parent=5 // pred_region
        %s244 = ssub.s32 %s16, 1
        %p245 = scmp.lt.s32.totalorder %s21, 1
        %s246 = scalar_select %p245, %s21, 1
        %s247 = smul.addr %s246, 8
        %s248 = scalar_lea.vmem %s0, %s247
        %p249 = pneg %p42
        %p250 = pneg %p39
        %p251 = pneg %p63
        %p252 = pneg %p60
        %p253 = pneg %p84
        %p254 = pneg %p81
        %p255 = pneg %p105
        %p256 = pneg %p102
        %p257 = pneg %p126
        %p258 = pneg %p123
        %p259 = pneg %p147
        %p260 = pneg %p144
        %p261 = pneg %p168
        %p262 = pneg %p165
        %p263 = pneg %p194
        %p264 = pneg %p191
        %s265 = sand.u32 %s181, 1
        %s266 = scalar_lea.sflag [#allocation3], %s265
        %s267 = sand.u32 %s181, 1
        %s268 = smul.addr %s267, 8
        %s269 = scalar_lea.vmem [#allocation2], %s268
        %p270 = scmp.lt.s32.totalorder %s21, 1
        %s271 = scalar_select %p270, %s21, 1
        %s272 = smul.addr %s271, 8
        %s273 = scalar_lea.vmem %s0, %s272
        %v274 = vld [vmem:[%s273] sm:$0xff]
        %vm275 = vcmask 261120
        %v276 = vsel %vm275, %v274, 0.0
        %277 = vadd.xlane.f32.xlu0 %v276
        %v278 = vpop.xlane.xlu0 %277
        %v279 = vrcp.pop 32.0
        %v280 = vmul.f32 32.0, %v279
        %v281 = vsub.f32 1.0, %v280
        %v282 = vmul.f32 %v279, %v281
        %v283 = vadd.f32 %v279, %v282
        %vm284 = vweird.f32 %v279
        %v285 = vsel %vm284, %v279, %v283
        %v286 = vmul.f32 %v278, %v285
        %v287 = vsub.f32 %v274, %v286
        %v288 = vmul.f32 %v287, %v287
        %v289 = vsel %vm275, %v288, 0.0
        %290 = vadd.xlane.f32.xlu0 %v289
        %v291 = vpop.xlane.xlu0 %290
        %v292 = vmul.f32 %v291, %v285
        %v293 = vadd.f32 %v292, 1e-05
        %v294 = vrsqrt.pop %v293
        %v295 = vmul.f32 %v294, %v293
        %v296 = vmul.f32 %v295, %v294
        %v297 = vmul.f32 0.5, %v296
        %v298 = vsub.f32 1.5, %v297
        %v299 = vmul.f32 %v294, %v298
        %vm300 = vweird.f32 %v293
        %vm301 = vweird.f32 %v294
        %vm302 = vmor %vm300, %vm301
        %v303 = vsel %vm302, %v294, %v299
        %v304 = vmul.f32 %v287, %v303
        %v305 = vld [vmem:[%s1] sm:$0x1]
        %v307 = vperm.slane %v305, 0
        %v309 = vmul.f32 %v304, %v307
        %v310 = vld [vmem:[%s2] sm:$0x1]
        %v312 = vperm.slane %v310, 0
        %v314 = vadd.f32 %v309, %v312
        %v315 = vld [vmem:[%s3] sm:$0xff]
        %v316 = vld [vmem:[%s3 + $0x8] sm:$0xff]
        %v317 = vld [vmem:[%s3 + $0x10] sm:$0xff]
        %v318 = vld [vmem:[%s3 + $0x18] sm:$0xff]
        %v319 = vld [vmem:[%s4] sm:$0x1]
        %v321 = vperm.slane %v319, 0
        %v324 = vsel %vm275, %v314, 0
        %326 = vmatpush.msra.mxu0 0.0
        %327 = vmatpush.msra.mxu0 0.0
        %328 = vmatpush.msra.mxu0 0.0
        %329 = vmatpush.msra.mxu0 0.0
        %330 = vmatpush.msra.mxu0 0.0
        %331 = vmatpush.msra.mxu0 0.0
        %332 = vmatpush.msra.mxu0 0.0
        %333 = vmatpush.msra.mxu0 0.0
        %334 = vmatpush.msra.mxu0 0.0
        %335 = vmatpush.msra.mxu0 0.0
        %336 = vmatpush.msra.mxu0 0.0
        %337 = vmatpush.msra.mxu0 0.0
        %338 = vmatpush.msra.mxu0 %v318
        %339 = vmatpush.msra.mxu0 %v317
        %340 = vmatpush.msra.mxu0 %v316
        %341 = vmatpush.msra.mxu0 %v315
        %342 = vmatmul.f32.gmra.mxu0 %v324
        %v343 = vpop.f32.mrf.mxu0
        %v344 = vadd.f32 %v321, %v343
        %345 = vdwg.mxu0
        %v346 = vmul.f32 %v344, 0.70710677
        %v347 = vand.u32 2147483647, %v346
        %v348 = vmul.f32 %v347, 0.3275911
        %v349 = vadd.f32 %v348, 1.0
        %v350 = vrcp.pop %v349
        %v351 = vmul.f32 %v349, %v350
        %v352 = vsub.f32 2.0, %v351
        %v353 = vmul.f32 %v350, %v352
        %v354 = vmul.f32 %v353, 1.0614054
        %v355 = vsub.f32 %v354, 1.4531521
        %v356 = vmul.f32 %v355, %v353
        %v357 = vadd.f32 %v356, 1.4214138
        %v358 = vmul.f32 %v357, %v353
        %v359 = vsub.f32 %v358, 0.28449672
        %v360 = vmul.f32 %v359, %v353
        %v361 = vadd.f32 %v360, 0.2548296
        %v362 = vmul.f32 %v361, %v353
        %v363 = vsub.f32 0.0, %v347
        %v364 = vmul.f32 %v363, %v347
        %v365 = vmul.f32 %v364, 1.442695
        %v366 = vpow.pop %v365
        %v367 = vmul.f32 %v362, %v366
        %v368 = vsub.f32 1.0, %v367
        %vm369 = vcmp.ge.f32.partialorder %v346, 0.0
        %v370 = vsub.f32 0.0, %v368
        %v371 = vsel %vm369, %v368, %v370
        %v372 = vmul.f32 %v344, 0.5
        %v373 = vadd.f32 %v371, 1.0
        %v374 = vmul.f32 %v372, %v373
        %v375 = vld [vmem:[%s5] sm:$0xff]
        %v376 = vld [vmem:[%s5 + $0x8] sm:$0xff]
        %v377 = vld [vmem:[%s5 + $0x10] sm:$0xff]
        %v378 = vld [vmem:[%s5 + $0x18] sm:$0xff]
        %v379 = vld [vmem:[%s5 + $0x20] sm:$0xff]
        %v380 = vld [vmem:[%s5 + $0x28] sm:$0xff]
        %v381 = vld [vmem:[%s5 + $0x30] sm:$0xff]
        %v382 = vld [vmem:[%s5 + $0x38] sm:$0xff]
        %v383 = vld [vmem:[%s5 + $0x40] sm:$0xff]
        %v384 = vld [vmem:[%s5 + $0x48] sm:$0xff]
        %v385 = vld [vmem:[%s5 + $0x50] sm:$0xff]
        %v386 = vld [vmem:[%s5 + $0x58] sm:$0xff]
        %v387 = vld [vmem:[%s5 + $0x60] sm:$0xff]
        %v388 = vld [vmem:[%s5 + $0x68] sm:$0xff]
        %v389 = vld [vmem:[%s5 + $0x70] sm:$0xff]
        %v390 = vld [vmem:[%s5 + $0x78] sm:$0xff]
        %v391 = vld [vmem:[%s6] sm:$0x1]
        %v393 = vperm.slane %v391, 0
        %395 = vmatpush.msra.mxu0 %v390
        %396 = vmatpush.msra.mxu0 %v389
        %397 = vmatpush.msra.mxu0 %v388
        %398 = vmatpush.msra.mxu0 %v387
        %399 = vmatpush.msra.mxu0 %v386
        %400 = vmatpush.msra.mxu0 %v385
        %401 = vmatpush.msra.mxu0 %v384
        %402 = vmatpush.msra.mxu0 %v383
        %403 = vmatpush.msra.mxu0 %v382
        %404 = vmatpush.msra.mxu0 %v381
        %405 = vmatpush.msra.mxu0 %v380
        %406 = vmatpush.msra.mxu0 %v379
        %407 = vmatpush.msra.mxu0 %v378
        %408 = vmatpush.msra.mxu0 %v377
        %409 = vmatpush.msra.mxu0 %v376
        %410 = vmatpush.msra.mxu0 %v375
        %411 = vmatmul.f32.gmra.mxu0 %v374
        %v412 = vpop.f32.mrf.mxu0
        %v413 = vadd.f32 %v393, %v412
        %414 = vdwg.mxu0
        %415 = vst.msk [vmem:[%s269] sm:$0xff] %vm275, %v413
        %s416 = sand.u32 %s181, 1
        %s417 = scalar_lea.sflag [#allocation3], %s416
        %s418 = sand.u32 %s181, 1
        %s419 = smul.addr %s418, 8
        %s420 = scalar_lea.vmem [#allocation2], %s419
        // Predicated region
        $region49: #{tpu_custom_call.1} parent=47 // pred_check
          %p421 = pneg %p191
        $region50: #{tpu_custom_call.1} parent=47 // pred_check_branch
          %423 = sbr.rel (%p421) target = $region52
        $region51: #{tpu_custom_call.1} parent=47 // pred_region
          %425 = vsyncadd %s417, 0
          %s426 = smul.addr %s21, 8
          %s427 = scalar_lea.hbm %s7, %s426
          %s429 = sshll.u32 %s420, 4
          %s430 = int_to_ptr.vmem [resolvable:$true] %s429
          %s431 = sshll.u32 %s427, 4
          %s432 = int_to_ptr.hbm [resolvable:$true] %s431
          %434 = dma.vmem_to_hbm [thread:$0]  %s430, 128, %s432, %s417
        $region52: #{tpu_custom_call.1} parent=47 // pred_fallthru
          _
      $region48: #{tpu_custom_call.1} parent=5 // pred_fallthru
        _
      %p435 = scmp.le.s32.totalorder 2, %s16
      // Predicated region
      $region53: #{tpu_custom_call.1} parent=5 // pred_check
        %p436 = pneg %p435
      $region54: #{tpu_custom_call.1} parent=5 // pred_check_branch
        %438 = sbr.rel (%p436) target = $region56
      $region55: #{tpu_custom_call.1} parent=5 // pred_region
        %s439 = ssub.s32 %s16, 2
        // Predicated region
        $region57: #{tpu_custom_call.1} parent=55 // pred_check
          %p440 = pneg %p197
        $region58: #{tpu_custom_call.1} parent=55 // pred_check_branch
          %442 = sbr.rel (%p440) target = $region60
        $region59: #{tpu_custom_call.1} parent=55 // pred_region
          %s443 = sand.u32 %s182, 1
          %s444 = scalar_lea.sflag [#allocation3], %s443
          %s445 = sand.u32 %s182, 1
          %s446 = smul.addr %s445, 8
          %s447 = scalar_lea.vmem [#allocation2], %s446
          %449 = dma.done %s444, 128
        $region60: #{tpu_custom_call.1} parent=55 // pred_fallthru
          _
      $region56: #{tpu_custom_call.1} parent=5 // pred_fallthru
        _
    $region6: #{tpu_custom_call.1} parent=1 // loop_footer
      %s20 = sadd.s32 1, %s16
    $region7: #{tpu_custom_call.1} parent=1 // loop_footer_branch
      %15 = sbr.rel target = $region3
    $region8: #{tpu_custom_call.1} parent=1 // loop_exit
      _
    %450 = vsyncpa [#allocation3], 1
    %s451 = scalar_lea.sflag [#allocation3], 1
    %452 = vsyncpa %s451, 1

</llo_original>
